<compile_context>
chip_gen: v7x
topology: tpu7x:2x2x1
jax: 0.10.0
libtpu: 0.0.40
codegen_flags: <defaults>
</compile_context>

<pallas_src>
import jax
import jax.numpy as jnp
from jax.experimental import pallas as pl
from jax.experimental.pallas import tpu as pltpu


def _round_up(n, m):
    return ((n + m - 1) // m) * m


def _make_mlp_kernel(layer_meta):
    """layer_meta: tuple of (row_start, rows_padded, out_dim, in_dim) per layer."""
    n_layers = len(layer_meta)

    def kernel(x_ref, p_ref, o_ref):
        h = x_ref[...]                                    # (in_features, tb), batch on lanes
        for li, (r0, rpad, dout, din) in enumerate(layer_meta):
            wb = p_ref[r0:r0 + rpad, :]                   # aligned (rpad, 128) load
            w = wb[:dout, :din]                           # (out, in)
            b = wb[:dout, din:din + 1]                    # (out, 1) -> broadcast over lanes
            h = jnp.dot(w, h, preferred_element_type=jnp.float32) + b
            if li < n_layers - 1:
                h = jnp.maximum(h, 0.0)                   # ReLU
        o_ref[...] = h.astype(o_ref.dtype)

    return kernel


def pack_params(params):
    """Pack [(W(out,in), b(out,)), ...] into one (R, 128) f32 slab + static metadata."""
    blocks = []
    meta = []
    r = 0
    for w, b in params:
        dout, din = w.shape
        assert din + 1 <= 128, "layer too wide for single-lane-tile packing"
        rpad = _round_up(dout, 8)
        blk = jnp.zeros((rpad, 128), jnp.float32)
        blk = blk.at[:dout, :din].set(w.astype(jnp.float32))
        blk = blk.at[:dout, din].set(b.astype(jnp.float32))
        blocks.append(blk)
        meta.append((r, rpad, dout, din))
        r += rpad
    return jnp.concatenate(blocks, axis=0), tuple(meta)


def basic_forward(x, params, *, max_batch_tile=512):
    """x: (B, in_features) float32; params: list of (W=(out,in), b=(out,)) like nn.Linear."""
    B, in_features = x.shape
    out_features = params[-1][0].shape[0]

    slab, meta = pack_params(params)
    kernel = _make_mlp_kernel(meta)

    # Batch on the lane axis; pad batch up to a lane-friendly tile multiple.
    if B <= max_batch_tile:
        b_pad = max(128, _round_up(B, 128))
        tb = b_pad
    else:
        tb = max_batch_tile
        b_pad = _round_up(B, tb)

    x_t = x.astype(jnp.float32).T                         # (in_features, B)
    if b_pad != B:
        x_t = jnp.pad(x_t, ((0, 0), (0, b_pad - B)))

    grid = (b_pad // tb,)
    out_t = pl.pallas_call(
        kernel,
        out_shape=jax.ShapeDtypeStruct((out_features, b_pad), jnp.float32),
        grid_spec=pltpu.PrefetchScalarGridSpec(
            num_scalar_prefetch=0,
            grid=grid,
            in_specs=[
                pl.BlockSpec((in_features, tb), lambda i: (0, i)),  # batch tile
                pl.BlockSpec(slab.shape, lambda i: (0, 0)),         # resident param slab
            ],
            out_specs=pl.BlockSpec((out_features, tb), lambda i: (0, i)),
        ),
        compiler_params=pltpu.CompilerParams(
            dimension_semantics=("parallel",)),
    )(x_t, slab)

    return out_t[:, :B].T                                 # back to (B, out_features)


def init_params(key, dims):
    """Deterministic init mimicking nn.Linear's U(-1/sqrt(fan_in), 1/sqrt(fan_in)).

    W stored in PyTorch layout (out_features, in_features), b as (out_features,).
    """
    params = []
    for i in range(len(dims) - 1):
        fan_in, fan_out = dims[i], dims[i + 1]
        key, kw, kb = jax.random.split(key, 3)
        bound = 1.0 / (fan_in ** 0.5)
        w = jax.random.uniform(kw, (fan_out, fan_in), jnp.float32, -bound, bound)
        b = jax.random.uniform(kb, (fan_out,), jnp.float32, -bound, bound)
        params.append((w, b))
    return params


def reference_forward(x, params):
    """Pure-JAX reference matching the PyTorch forward: relu(x @ W.T + b) x4, then linear."""
    h = x
    for i, (w, b) in enumerate(params):
        h = h @ w.T + b
        if i < len(params) - 1:
            h = jnp.maximum(h, 0.0)
    return h


if __name__ == "__main__":
    key = jax.random.PRNGKey(0)
    dims = (4, 25, 17, 13, 9, 3)  # in_features, h1..h4, out_features

    kx1, kx2, kp = jax.random.split(key, 3)
    params = init_params(kp, dims)

    for batch, kx in ((8, kx1), (256, kx2)):
        x = jax.random.normal(kx, (batch, dims[0]), jnp.float32)
        out = basic_forward(x, params)
        out = jax.block_until_ready(out)

        ref = reference_forward(x, params)
        assert out.shape == (batch, dims[-1]), out.shape
        assert jnp.allclose(out, ref, atol=1e-5, rtol=1e-5), (
            f"mismatch vs reference at batch={batch}")

    print("KERNEL_OK")
</pallas_src>

<mosaic_0001>
module attributes {stable_mosaic.version = 11 : i64} {
  func.func @kernel(%arg0: i32, %arg1: memref<4x128xf32, #tpu.memory_space<vmem>>, %arg2: memref<96x128xf32, #tpu.memory_space<vmem>>, %arg3: memref<3x128xf32, #tpu.memory_space<vmem>>) attributes {dimension_semantics = [#tpu.dimension_semantics<parallel>], iteration_bounds = array<i64: 1>, scalar_prefetch = 0 : i64, scratch_operands = 0 : i64, tpu.core_type = #tpu.core_type<tc>, window_params = [{transform_indices = @transform_0, window_bounds = array<i64: 4, 128>}, {pipeline_mode = #tpu.pipeline_mode<synchronous>, transform_indices = @transform_1, window_bounds = array<i64: 96, 128>}, {transform_indices = @transform_2, window_bounds = array<i64: 3, 128>}]} {
    %c0 = arith.constant 0 : index
    %c0_0 = arith.constant 0 : index
    %0 = vector.load %arg1[%c0, %c0_0] : memref<4x128xf32, #tpu.memory_space<vmem>>, vector<4x128xf32>
    %c0_1 = arith.constant 0 : index
    %c0_2 = arith.constant 0 : index
    %1 = vector.load %arg2[%c0_1, %c0_2] : memref<96x128xf32, #tpu.memory_space<vmem>>, vector<32x128xf32>
    %2 = vector.extract_strided_slice %1 {offsets = [0, 0], sizes = [25, 4], strides = [1, 1]} : vector<32x128xf32> to vector<25x4xf32>
    %3 = vector.extract_strided_slice %1 {offsets = [0, 4], sizes = [25, 1], strides = [1, 1]} : vector<32x128xf32> to vector<25x1xf32>
    %cst = arith.constant dense<0.000000e+00> : vector<25x128xf32>
    %4 = tpu.matmul %2, %0, %cst {dimension_numbers = #tpu.dot_dimension_numbers<[1], [0], [0], [1], [0, 0, 1, 1], [], []>} : vector<25x4xf32>, vector<4x128xf32>, vector<25x128xf32> -> vector<25x128xf32>
    %5 = vector.broadcast %3 : vector<25x1xf32> to vector<25x128xf32>
    %6 = arith.addf %4, %5 : vector<25x128xf32>
    %cst_3 = arith.constant 0.000000e+00 : f32
    %7 = vector.broadcast %cst_3 : f32 to vector<25x128xf32>
    %8 = arith.maximumf %6, %7 : vector<25x128xf32>
    %c32 = arith.constant 32 : index
    %c0_4 = arith.constant 0 : index
    %9 = vector.load %arg2[%c32, %c0_4] : memref<96x128xf32, #tpu.memory_space<vmem>>, vector<24x128xf32>
    %10 = vector.extract_strided_slice %9 {offsets = [0, 0], sizes = [17, 25], strides = [1, 1]} : vector<24x128xf32> to vector<17x25xf32>
    %11 = vector.extract_strided_slice %9 {offsets = [0, 25], sizes = [17, 1], strides = [1, 1]} : vector<24x128xf32> to vector<17x1xf32>
    %cst_5 = arith.constant dense<0.000000e+00> : vector<17x128xf32>
    %12 = tpu.matmul %10, %8, %cst_5 {dimension_numbers = #tpu.dot_dimension_numbers<[1], [0], [0], [1], [0, 0, 1, 1], [], []>} : vector<17x25xf32>, vector<25x128xf32>, vector<17x128xf32> -> vector<17x128xf32>
    %13 = vector.broadcast %11 : vector<17x1xf32> to vector<17x128xf32>
    %14 = arith.addf %12, %13 : vector<17x128xf32>
    %cst_6 = arith.constant 0.000000e+00 : f32
    %15 = vector.broadcast %cst_6 : f32 to vector<17x128xf32>
    %16 = arith.maximumf %14, %15 : vector<17x128xf32>
    %c56 = arith.constant 56 : index
    %c0_7 = arith.constant 0 : index
    %17 = vector.load %arg2[%c56, %c0_7] : memref<96x128xf32, #tpu.memory_space<vmem>>, vector<16x128xf32>
    %18 = vector.extract_strided_slice %17 {offsets = [0, 0], sizes = [13, 17], strides = [1, 1]} : vector<16x128xf32> to vector<13x17xf32>
    %19 = vector.extract_strided_slice %17 {offsets = [0, 17], sizes = [13, 1], strides = [1, 1]} : vector<16x128xf32> to vector<13x1xf32>
    %cst_8 = arith.constant dense<0.000000e+00> : vector<13x128xf32>
    %20 = tpu.matmul %18, %16, %cst_8 {dimension_numbers = #tpu.dot_dimension_numbers<[1], [0], [0], [1], [0, 0, 1, 1], [], []>} : vector<13x17xf32>, vector<17x128xf32>, vector<13x128xf32> -> vector<13x128xf32>
    %21 = vector.broadcast %19 : vector<13x1xf32> to vector<13x128xf32>
    %22 = arith.addf %20, %21 : vector<13x128xf32>
    %cst_9 = arith.constant 0.000000e+00 : f32
    %23 = vector.broadcast %cst_9 : f32 to vector<13x128xf32>
    %24 = arith.maximumf %22, %23 : vector<13x128xf32>
    %c72 = arith.constant 72 : index
    %c0_10 = arith.constant 0 : index
    %25 = vector.load %arg2[%c72, %c0_10] : memref<96x128xf32, #tpu.memory_space<vmem>>, vector<16x128xf32>
    %26 = vector.extract_strided_slice %25 {offsets = [0, 0], sizes = [9, 13], strides = [1, 1]} : vector<16x128xf32> to vector<9x13xf32>
    %27 = vector.extract_strided_slice %25 {offsets = [0, 13], sizes = [9, 1], strides = [1, 1]} : vector<16x128xf32> to vector<9x1xf32>
    %cst_11 = arith.constant dense<0.000000e+00> : vector<9x128xf32>
    %28 = tpu.matmul %26, %24, %cst_11 {dimension_numbers = #tpu.dot_dimension_numbers<[1], [0], [0], [1], [0, 0, 1, 1], [], []>} : vector<9x13xf32>, vector<13x128xf32>, vector<9x128xf32> -> vector<9x128xf32>
    %29 = vector.broadcast %27 : vector<9x1xf32> to vector<9x128xf32>
    %30 = arith.addf %28, %29 : vector<9x128xf32>
    %cst_12 = arith.constant 0.000000e+00 : f32
    %31 = vector.broadcast %cst_12 : f32 to vector<9x128xf32>
    %32 = arith.maximumf %30, %31 : vector<9x128xf32>
    %c88 = arith.constant 88 : index
    %c0_13 = arith.constant 0 : index
    %33 = vector.load %arg2[%c88, %c0_13] : memref<96x128xf32, #tpu.memory_space<vmem>>, vector<8x128xf32>
    %34 = vector.extract_strided_slice %33 {offsets = [0, 0], sizes = [3, 9], strides = [1, 1]} : vector<8x128xf32> to vector<3x9xf32>
    %35 = vector.extract_strided_slice %33 {offsets = [0, 9], sizes = [3, 1], strides = [1, 1]} : vector<8x128xf32> to vector<3x1xf32>
    %cst_14 = arith.constant dense<0.000000e+00> : vector<3x128xf32>
    %36 = tpu.matmul %34, %32, %cst_14 {dimension_numbers = #tpu.dot_dimension_numbers<[1], [0], [0], [1], [0, 0, 1, 1], [], []>} : vector<3x9xf32>, vector<9x128xf32>, vector<3x128xf32> -> vector<3x128xf32>
    %37 = vector.broadcast %35 : vector<3x1xf32> to vector<3x128xf32>
    %38 = arith.addf %36, %37 : vector<3x128xf32>
    %c0_15 = arith.constant 0 : index
    %c0_16 = arith.constant 0 : index
    %39 = vector.load %arg3[%c0_15, %c0_16] : memref<3x128xf32, #tpu.memory_space<vmem>>, vector<3x128xf32>
    tpu.vector_store %arg3[%c0_15, %c0_16], %38 {strides = array<i32>} : memref<3x128xf32, #tpu.memory_space<vmem>>, vector<3x128xf32>,
    return
  }
  func.func @transform_0(%arg0: i32) -> (i32, i32) {
    %c0_i32 = arith.constant 0 : i32
    %c0_i32_0 = arith.constant 0 : i32
    return %c0_i32, %arg0 : i32, i32
  }
  func.func @transform_1(%arg0: i32) -> (i32, i32) {
    %c0_i32 = arith.constant 0 : i32
    %c0_i32_0 = arith.constant 0 : i32
    %c0_i32_1 = arith.constant 0 : i32
    return %c0_i32, %c0_i32_0 : i32, i32
  }
  func.func @transform_2(%arg0: i32) -> (i32, i32) {
    %c0_i32 = arith.constant 0 : i32
    %c0_i32_0 = arith.constant 0 : i32
    return %c0_i32, %arg0 : i32, i32
  }
}

</mosaic_0001>

<llo_original>
// kernel: tpu_custom_call.1
$region0: #{tpu_custom_call.1}
  #allocation0 [shape = 'u32[]', space=smem, size = 0x4, offset = 0x4, fixed_abs, tag = 'smem constant byte address 0x4 - core index']
  #allocation1 [shape = 'u32[144,128]{1,0:T(1,128)}', space=vmem, size = 0x12000, scoped, tag = 'internal scratch']
  %s0 = inlined_call_operand.hbm [shape: f32[4,128], index: 0, kind: input, shape index: {}]
  %s1 = inlined_call_operand.hbm [shape: f32[96,128], index: 1, kind: input, shape index: {}]
  %s2 = inlined_call_operand.hbm [shape: f32[3,128], index: 2, kind: output, shape index: {}]
  %s3 = sld [smem:[#allocation0]]
  $region26: #{tpu_custom_call.1} parent=0
    _
  %s5 = ssub.s32 1, %s3
  %s6 = scalar_select 0, %s5, %s3
  $region1: #{tpu_custom_call.1} parent=0
    #allocation2 [shape = 'u8[2048]{0}', space=vmem, size = 0x800, scoped, tag = 'input window, operand 0, single buffered']
    #allocation3 [shape = 's32[1]{0}', space=sflag, size = 0x4, scoped, tag = 'scoped memory for tpu_custom_call.1']
    #allocation4 [shape = 's32[1]{0}', space=sflag, size = 0x4, scoped, tag = 'scoped memory for tpu_custom_call.1']
    #allocation5 [shape = 'u8[49152]{0}', space=vmem, size = 0xc000, scoped, tag = 'input window, operand 1, single buffered']
    #allocation6 [shape = 's32[1]{0}', space=sflag, size = 0x4, scoped, tag = 'scoped memory for tpu_custom_call.1']
    #allocation7 [shape = 'u8[2048]{0}', space=vmem, size = 0x800, scoped, tag = 'output window, operand 0, single buffered']
    %7 = vsyncpa [#allocation3], 0
    %8 = vsyncpa [#allocation6], 0
    %9 = vsyncpa [#allocation4], 0
    // Predicated region
    $region2: #{tpu_custom_call.1} parent=1 // pred_check
      _
    $region3: #{tpu_custom_call.1} parent=1 // pred_check_branch
      %11 = sbr.rel (0) target = $region5
    $region4: #{tpu_custom_call.1} parent=1 // pred_region
      %s13 = ssub.s32 64, 64
      %14 = vsyncadd [#allocation3], %s13
      %s16 = sshll.u32 [#allocation2], 4
      %s17 = int_to_ptr.vmem [resolvable:$true] %s16
      %19 = dma.hbm_to_vmem [thread:$0]  %s0, 64, %s17, [#allocation3]
    $region5: #{tpu_custom_call.1} parent=1 // pred_fallthru
      _
    // Predicated region
    $region6: #{tpu_custom_call.1} parent=1 // pred_check
      _
    $region7: #{tpu_custom_call.1} parent=1 // pred_check_branch
      %21 = sbr.rel (0) target = $region9
    $region8: #{tpu_custom_call.1} parent=1 // pred_region
      %s23 = ssub.s32 1536, 1536
      %24 = vsyncadd [#allocation6], %s23
      %s25 = sshll.u32 [#allocation5], 4
      %s26 = int_to_ptr.vmem [resolvable:$true] %s25
      %31 = dma.hbm_to_vmem [thread:$0]  %s1, 1536, %s26, [#allocation6], 128, 128, 8
    $region9: #{tpu_custom_call.1} parent=1 // pred_fallthru
      _
    // Predicated region
    $region10: #{tpu_custom_call.1} parent=1 // pred_check
      _
    $region11: #{tpu_custom_call.1} parent=1 // pred_check_branch
      %33 = sbr.rel (0) target = $region13
    $region12: #{tpu_custom_call.1} parent=1 // pred_region
      %34 = dma.done [#allocation3], 64
    $region13: #{tpu_custom_call.1} parent=1 // pred_fallthru
      _
    // Predicated region
    $region14: #{tpu_custom_call.1} parent=1 // pred_check
      _
    $region15: #{tpu_custom_call.1} parent=1 // pred_check_branch
      %36 = sbr.rel (0) target = $region17
    $region16: #{tpu_custom_call.1} parent=1 // pred_region
      %37 = dma.done [#allocation6], 1536
    $region17: #{tpu_custom_call.1} parent=1 // pred_fallthru
      _
    %v38 = vld [vmem:[#allocation2] sm:$0xf]
    %v39 = vld [vmem:[#allocation5] sm:$0xff]
    %v40 = vld [vmem:[#allocation5 + $0x8] sm:$0xff]
    %v41 = vld [vmem:[#allocation5 + $0x10] sm:$0xff]
    %v42 = vld [vmem:[#allocation5 + $0x18] sm:$0xff]
    %44 = vset.pattern.permute.xlu0 4
    %45 = vperm.xlu0 %44, %v39
    %v46 = vpop.permute.xlu0 %45
    %49 = vset.pattern.permute.xlu0 4
    %50 = vperm.xlu0 %49, %v40
    %v51 = vpop.permute.xlu0 %50
    %54 = vset.pattern.permute.xlu0 4
    %55 = vperm.xlu0 %54, %v41
    %v56 = vpop.permute.xlu0 %55
    %59 = vset.pattern.permute.xlu0 4
    %60 = vperm.xlu0 %59, %v42
    %v61 = vpop.permute.xlu0 %60
    %vm63 = vcmask 31744
    %v64 = vsel %vm63, %v39, 0
    %v66 = vsel %vm63, %v40, 0
    %v68 = vsel %vm63, %v41, 0
    %v70 = vsel %vm63, %v42, 0
    %vm72 = vcmask 1043456
    %v74 = vsel %vm72, %v38, 0
    %76 = vmatprep.subr.mxu0 0.0
    %77 = vmatpush1.msra.mxu0 %v74
    %78 = vmatprep.subr.mxu0 0.0
    %79 = vmatpush1.msra.mxu0 0.0
    %80 = vmatprep.subr.mxu0 0.0
    %81 = vmatpush1.msra.mxu0 0.0
    %82 = vmatprep.subr.mxu0 0.0
    %83 = vmatpush1.msra.mxu0 0.0
    %84 = vmatprep.subr.mxu0 0.0
    %85 = vmatpush1.msra.mxu0 0.0
    %86 = vmatprep.subr.mxu0 0.0
    %87 = vmatpush1.msra.mxu0 0.0
    %88 = vmatprep.subr.mxu0 0.0
    %89 = vmatpush1.msra.mxu0 0.0
    %90 = vmatprep.subr.mxu0 0.0
    %91 = vmatpush1.msra.mxu0 0.0
    %92 = vmatprep.subr.mxu0 0.0
    %93 = vmatpush1.msra.mxu0 0.0
    %94 = vmatprep.subr.mxu0 0.0
    %95 = vmatpush1.msra.mxu0 0.0
    %96 = vmatprep.subr.mxu0 0.0
    %97 = vmatpush1.msra.mxu0 0.0
    %98 = vmatprep.subr.mxu0 0.0
    %99 = vmatpush1.msra.mxu0 0.0
    %100 = vmatprep.subr.mxu0 0.0
    %101 = vmatpush1.msra.mxu0 0.0
    %102 = vmatprep.subr.mxu0 0.0
    %103 = vmatpush1.msra.mxu0 0.0
    %104 = vmatprep.subr.mxu0 0.0
    %105 = vmatpush1.msra.mxu0 0.0
    %106 = vmatprep.subr.mxu0 0.0
    %107 = vmatpush1.msra.mxu0 0.0
    %108 = vmatprep.subr.mxu0 0.0
    %109 = vmatpush1.msra.mxu0 0.0
    %110 = vmatprep.subr.mxu0 0.0
    %111 = vmatpush1.msra.mxu0 0.0
    %112 = vmatprep.subr.mxu0 0.0
    %113 = vmatpush1.msra.mxu0 0.0
    %114 = vmatprep.subr.mxu0 0.0
    %115 = vmatpush1.msra.mxu0 0.0
    %116 = vmatprep.subr.mxu0 0.0
    %117 = vmatpush1.msra.mxu0 0.0
    %118 = vmatprep.subr.mxu0 0.0
    %119 = vmatpush1.msra.mxu0 0.0
    %120 = vmatprep.subr.mxu0 0.0
    %121 = vmatpush1.msra.mxu0 0.0
    %122 = vmatprep.subr.mxu0 0.0
    %123 = vmatpush1.msra.mxu0 0.0
    %124 = vmatprep.subr.mxu0 0.0
    %125 = vmatpush1.msra.mxu0 0.0
    %126 = vmatprep.subr.mxu0 0.0
    %127 = vmatpush1.msra.mxu0 0.0
    %128 = vmatprep.subr.mxu0 0.0
    %129 = vmatpush1.msra.mxu0 0.0
    %130 = vmatprep.subr.mxu0 0.0
    %131 = vmatpush1.msra.mxu0 0.0
    %132 = vmatprep.subr.mxu0 0.0
    %133 = vmatpush1.msra.mxu0 0.0
    %134 = vmatprep.subr.mxu0 0.0
    %135 = vmatpush1.msra.mxu0 0.0
    %136 = vmatprep.subr.mxu0 0.0
    %137 = vmatpush1.msra.mxu0 0.0
    %138 = vmatprep.subr.mxu0 0.0
    %139 = vmatpush1.msra.mxu0 0.0
    %140 = vmatprep.mubr.f32.mxu0 0.0
    %141 = vmatmul.mubr.f32.gmra.mrb[0].mxu0 %v64
    %v142 = vpop.f32.mrb[0].mxu0
    %v143 = vadd.f32 %v46, %v142
    %v144 = vpop.f32.mrb[0].mxu0
    %145 = vmatprep.mubr.f32.mxu0 0.0
    %146 = vmatmul.mubr.f32.gmra.mrb[0].mxu0 %v66
    %v147 = vpop.f32.mrb[0].mxu0
    %v148 = vadd.f32 %v51, %v147
    %v149 = vpop.f32.mrb[0].mxu0
    %150 = vmatprep.mubr.f32.mxu0 0.0
    %151 = vmatmul.mubr.f32.gmra.mrb[0].mxu0 %v68
    %v152 = vpop.f32.mrb[0].mxu0
    %v153 = vadd.f32 %v56, %v152
    %v154 = vpop.f32.mrb[0].mxu0
    %155 = vmatprep.mubr.f32.mxu0 0.0
    %156 = vmatmul.mubr.f32.gmra.mrb[0].mxu0 %v70
    %v157 = vpop.f32.mrb[0].mxu0
    %v158 = vadd.f32 %v61, %v157
    %v159 = vpop.f32.mrb[0].mxu0
    %160 = vdwg.mxu0
    %v161 = vmax.f32 %v143, 0.0
    %v162 = vmax.f32 %v148, 0.0
    %v163 = vmax.f32 %v153, 0.0
    %v164 = vmax.f32 %v158, 0.0
    %v165 = vld [vmem:[#allocation5 + $0x20] sm:$0xff]
    %v166 = vld [vmem:[#allocation5 + $0x28] sm:$0xff]
    %v167 = vld [vmem:[#allocation5 + $0x30] sm:$0xff]
    %169 = vset.pattern.permute.xlu0 25
    %170 = vperm.xlu0 %169, %v165
    %v171 = vpop.permute.xlu0 %170
    %174 = vset.pattern.permute.xlu0 25
    %175 = vperm.xlu0 %174, %v166
    %v176 = vpop.permute.xlu0 %175
    %179 = vset.pattern.permute.xlu0 25
    %180 = vperm.xlu0 %179, %v167
    %v181 = vpop.permute.xlu0 %180
    %vm183 = vcmask 203776
    %v184 = vsel %vm183, %v165, 0
    %v186 = vsel %vm183, %v166, 0
    %v188 = vsel %vm183, %v167, 0
    %vm190 = vcmask 1040384
    %v192 = vsel %vm190, %v164, 0
    %194 = vmatprep.subr.mxu0 0.0
    %195 = vmatpush1.msra.mxu0 %v161
    %196 = vmatprep.subr.mxu0 0.0
    %197 = vmatpush1.msra.mxu0 %v162
    %198 = vmatprep.subr.mxu0 0.0
    %199 = vmatpush1.msra.mxu0 %v163
    %200 = vmatprep.subr.mxu0 0.0
    %201 = vmatpush1.msra.mxu0 %v192
    %202 = vmatprep.subr.mxu0 0.0
    %203 = vmatpush1.msra.mxu0 0.0
    %204 = vmatprep.subr.mxu0 0.0
    %205 = vmatpush1.msra.mxu0 0.0
    %206 = vmatprep.subr.mxu0 0.0
    %207 = vmatpush1.msra.mxu0 0.0
    %208 = vmatprep.subr.mxu0 0.0
    %209 = vmatpush1.msra.mxu0 0.0
    %210 = vmatprep.subr.mxu0 0.0
    %211 = vmatpush1.msra.mxu0 0.0
    %212 = vmatprep.subr.mxu0 0.0
    %213 = vmatpush1.msra.mxu0 0.0
    %214 = vmatprep.subr.mxu0 0.0
    %215 = vmatpush1.msra.mxu0 0.0
    %216 = vmatprep.subr.mxu0 0.0
    %217 = vmatpush1.msra.mxu0 0.0
    %218 = vmatprep.subr.mxu0 0.0
    %219 = vmatpush1.msra.mxu0 0.0
    %220 = vmatprep.subr.mxu0 0.0
    %221 = vmatpush1.msra.mxu0 0.0
    %222 = vmatprep.subr.mxu0 0.0
    %223 = vmatpush1.msra.mxu0 0.0
    %224 = vmatprep.subr.mxu0 0.0
    %225 = vmatpush1.msra.mxu0 0.0
    %226 = vmatprep.subr.mxu0 0.0
    %227 = vmatpush1.msra.mxu0 0.0
    %228 = vmatprep.subr.mxu0 0.0
    %229 = vmatpush1.msra.mxu0 0.0
    %230 = vmatprep.subr.mxu0 0.0
    %231 = vmatpush1.msra.mxu0 0.0
    %232 = vmatprep.subr.mxu0 0.0
    %233 = vmatpush1.msra.mxu0 0.0
    %234 = vmatprep.subr.mxu0 0.0
    %235 = vmatpush1.msra.mxu0 0.0
    %236 = vmatprep.subr.mxu0 0.0
    %237 = vmatpush1.msra.mxu0 0.0
    %238 = vmatprep.subr.mxu0 0.0
    %239 = vmatpush1.msra.mxu0 0.0
    %240 = vmatprep.subr.mxu0 0.0
    %241 = vmatpush1.msra.mxu0 0.0
    %242 = vmatprep.subr.mxu0 0.0
    %243 = vmatpush1.msra.mxu0 0.0
    %244 = vmatprep.subr.mxu0 0.0
    %245 = vmatpush1.msra.mxu0 0.0
    %246 = vmatprep.subr.mxu0 0.0
    %247 = vmatpush1.msra.mxu0 0.0
    %248 = vmatprep.subr.mxu0 0.0
    %249 = vmatpush1.msra.mxu0 0.0
    %250 = vmatprep.subr.mxu0 0.0
    %251 = vmatpush1.msra.mxu0 0.0
    %252 = vmatprep.subr.mxu0 0.0
    %253 = vmatpush1.msra.mxu0 0.0
    %254 = vmatprep.subr.mxu0 0.0
    %255 = vmatpush1.msra.mxu0 0.0
    %256 = vmatprep.subr.mxu0 0.0
    %257 = vmatpush1.msra.mxu0 0.0
    %258 = vmatprep.mubr.f32.mxu0 0.0
    %259 = vmatmul.mubr.f32.gmra.mrb[0].mxu0 %v184
    %v260 = vpop.f32.mrb[0].mxu0
    %v261 = vadd.f32 %v171, %v260
    %v262 = vpop.f32.mrb[0].mxu0
    %263 = vmatprep.mubr.f32.mxu0 0.0
    %264 = vmatmul.mubr.f32.gmra.mrb[0].mxu0 %v186
    %v265 = vpop.f32.mrb[0].mxu0
    %v266 = vadd.f32 %v176, %v265
    %v267 = vpop.f32.mrb[0].mxu0
    %268 = vmatprep.mubr.f32.mxu0 0.0
    %269 = vmatmul.mubr.f32.gmra.mrb[0].mxu0 %v188
    %v270 = vpop.f32.mrb[0].mxu0
    %v271 = vadd.f32 %v181, %v270
    %v272 = vpop.f32.mrb[0].mxu0
    %273 = vdwg.mxu0
    %v274 = vmax.f32 %v261, 0.0
    %v275 = vmax.f32 %v266, 0.0
    %v276 = vmax.f32 %v271, 0.0
    %v277 = vld [vmem:[#allocation5 + $0x38] sm:$0xff]
    %v278 = vld [vmem:[#allocation5 + $0x40] sm:$0xff]
    %280 = vset.pattern.permute.xlu0 17
    %281 = vperm.xlu0 %280, %v277
    %v282 = vpop.permute.xlu0 %281
    %285 = vset.pattern.permute.xlu0 17
    %286 = vperm.xlu0 %285, %v278
    %v287 = vpop.permute.xlu0 %286
    %vm289 = vcmask 138240
    %v290 = vsel %vm289, %v277, 0
    %v292 = vsel %vm289, %v278, 0
    %v295 = vsel %vm190, %v276, 0
    %297 = vmatprep.subr.mxu0 0.0
    %298 = vmatpush1.msra.mxu0 %v274
    %299 = vmatprep.subr.mxu0 0.0
    %300 = vmatpush1.msra.mxu0 %v275
    %301 = vmatprep.subr.mxu0 0.0
    %302 = vmatpush1.msra.mxu0 %v295
    %303 = vmatprep.subr.mxu0 0.0
    %304 = vmatpush1.msra.mxu0 0.0
    %305 = vmatprep.subr.mxu0 0.0
    %306 = vmatpush1.msra.mxu0 0.0
    %307 = vmatprep.subr.mxu0 0.0
    %308 = vmatpush1.msra.mxu0 0.0
    %309 = vmatprep.subr.mxu0 0.0
    %310 = vmatpush1.msra.mxu0 0.0
    %311 = vmatprep.subr.mxu0 0.0
    %312 = vmatpush1.msra.mxu0 0.0
    %313 = vmatprep.subr.mxu0 0.0
    %314 = vmatpush1.msra.mxu0 0.0
    %315 = vmatprep.subr.mxu0 0.0
    %316 = vmatpush1.msra.mxu0 0.0
    %317 = vmatprep.subr.mxu0 0.0
    %318 = vmatpush1.msra.mxu0 0.0
    %319 = vmatprep.subr.mxu0 0.0
    %320 = vmatpush1.msra.mxu0 0.0
    %321 = vmatprep.subr.mxu0 0.0
    %322 = vmatpush1.msra.mxu0 0.0
    %323 = vmatprep.subr.mxu0 0.0
    %324 = vmatpush1.msra.mxu0 0.0
    %325 = vmatprep.subr.mxu0 0.0
    %326 = vmatpush1.msra.mxu0 0.0
    %327 = vmatprep.subr.mxu0 0.0
    %328 = vmatpush1.msra.mxu0 0.0
    %329 = vmatprep.subr.mxu0 0.0
    %330 = vmatpush1.msra.mxu0 0.0
    %331 = vmatprep.subr.mxu0 0.0
    %332 = vmatpush1.msra.mxu0 0.0
    %333 = vmatprep.subr.mxu0 0.0
    %334 = vmatpush1.msra.mxu0 0.0
    %335 = vmatprep.subr.mxu0 0.0
    %336 = vmatpush1.msra.mxu0 0.0
    %337 = vmatprep.subr.mxu0 0.0
    %338 = vmatpush1.msra.mxu0 0.0
    %339 = vmatprep.subr.mxu0 0.0
    %340 = vmatpush1.msra.mxu0 0.0
    %341 = vmatprep.subr.mxu0 0.0
    %342 = vmatpush1.msra.mxu0 0.0
    %343 = vmatprep.subr.mxu0 0.0
    %344 = vmatpush1.msra.mxu0 0.0
    %345 = vmatprep.subr.mxu0 0.0
    %346 = vmatpush1.msra.mxu0 0.0
    %347 = vmatprep.subr.mxu0 0.0
    %348 = vmatpush1.msra.mxu0 0.0
    %349 = vmatprep.subr.mxu0 0.0
    %350 = vmatpush1.msra.mxu0 0.0
    %351 = vmatprep.subr.mxu0 0.0
    %352 = vmatpush1.msra.mxu0 0.0
    %353 = vmatprep.subr.mxu0 0.0
    %354 = vmatpush1.msra.mxu0 0.0
    %355 = vmatprep.subr.mxu0 0.0
    %356 = vmatpush1.msra.mxu0 0.0
    %357 = vmatprep.subr.mxu0 0.0
    %358 = vmatpush1.msra.mxu0 0.0
    %359 = vmatprep.subr.mxu0 0.0
    %360 = vmatpush1.msra.mxu0 0.0
    %361 = vmatprep.mubr.f32.mxu0 0.0
    %362 = vmatmul.mubr.f32.gmra.mrb[0].mxu0 %v290
    %v363 = vpop.f32.mrb[0].mxu0
    %v364 = vadd.f32 %v282, %v363
    %v365 = vpop.f32.mrb[0].mxu0
    %366 = vmatprep.mubr.f32.mxu0 0.0
    %367 = vmatmul.mubr.f32.gmra.mrb[0].mxu0 %v292
    %v368 = vpop.f32.mrb[0].mxu0
    %v369 = vadd.f32 %v287, %v368
    %v370 = vpop.f32.mrb[0].mxu0
    %371 = vdwg.mxu0
    %v372 = vmax.f32 %v364, 0.0
    %v373 = vmax.f32 %v369, 0.0
    %v374 = vld [vmem:[#allocation5 + $0x48] sm:$0xff]
    %v375 = vld [vmem:[#allocation5 + $0x50] sm:$0xff]
    %377 = vset.pattern.permute.xlu0 13
    %378 = vperm.xlu0 %377, %v374
    %v379 = vpop.permute.xlu0 %378
    %382 = vset.pattern.permute.xlu0 13
    %383 = vperm.xlu0 %382, %v375
    %v384 = vpop.permute.xlu0 %383
    %vm386 = vcmask 105472
    %v387 = vsel %vm386, %v374, 0
    %v389 = vsel %vm386, %v375, 0
    %vm391 = vcmask 1044480
    %v393 = vsel %vm391, %v373, 0
    %395 = vmatprep.subr.mxu0 0.0
    %396 = vmatpush1.msra.mxu0 %v372
    %397 = vmatprep.subr.mxu0 0.0
    %398 = vmatpush1.msra.mxu0 %v393
    %399 = vmatprep.subr.mxu0 0.0
    %400 = vmatpush1.msra.mxu0 0.0
    %401 = vmatprep.subr.mxu0 0.0
    %402 = vmatpush1.msra.mxu0 0.0
    %403 = vmatprep.subr.mxu0 0.0
    %404 = vmatpush1.msra.mxu0 0.0
    %405 = vmatprep.subr.mxu0 0.0
    %406 = vmatpush1.msra.mxu0 0.0
    %407 = vmatprep.subr.mxu0 0.0
    %408 = vmatpush1.msra.mxu0 0.0
    %409 = vmatprep.subr.mxu0 0.0
    %410 = vmatpush1.msra.mxu0 0.0
    %411 = vmatprep.subr.mxu0 0.0
    %412 = vmatpush1.msra.mxu0 0.0
    %413 = vmatprep.subr.mxu0 0.0
    %414 = vmatpush1.msra.mxu0 0.0
    %415 = vmatprep.subr.mxu0 0.0
    %416 = vmatpush1.msra.mxu0 0.0
    %417 = vmatprep.subr.mxu0 0.0
    %418 = vmatpush1.msra.mxu0 0.0
    %419 = vmatprep.subr.mxu0 0.0
    %420 = vmatpush1.msra.mxu0 0.0
    %421 = vmatprep.subr.mxu0 0.0
    %422 = vmatpush1.msra.mxu0 0.0
    %423 = vmatprep.subr.mxu0 0.0
    %424 = vmatpush1.msra.mxu0 0.0
    %425 = vmatprep.subr.mxu0 0.0
    %426 = vmatpush1.msra.mxu0 0.0
    %427 = vmatprep.subr.mxu0 0.0
    %428 = vmatpush1.msra.mxu0 0.0
    %429 = vmatprep.subr.mxu0 0.0
    %430 = vmatpush1.msra.mxu0 0.0
    %431 = vmatprep.subr.mxu0 0.0
    %432 = vmatpush1.msra.mxu0 0.0
    %433 = vmatprep.subr.mxu0 0.0
    %434 = vmatpush1.msra.mxu0 0.0
    %435 = vmatprep.subr.mxu0 0.0
    %436 = vmatpush1.msra.mxu0 0.0
    %437 = vmatprep.subr.mxu0 0.0
    %438 = vmatpush1.msra.mxu0 0.0
    %439 = vmatprep.subr.mxu0 0.0
    %440 = vmatpush1.msra.mxu0 0.0
    %441 = vmatprep.subr.mxu0 0.0
    %442 = vmatpush1.msra.mxu0 0.0
    %443 = vmatprep.subr.mxu0 0.0
    %444 = vmatpush1.msra.mxu0 0.0
    %445 = vmatprep.subr.mxu0 0.0
    %446 = vmatpush1.msra.mxu0 0.0
    %447 = vmatprep.subr.mxu0 0.0
    %448 = vmatpush1.msra.mxu0 0.0
    %449 = vmatprep.subr.mxu0 0.0
    %450 = vmatpush1.msra.mxu0 0.0
    %451 = vmatprep.subr.mxu0 0.0
    %452 = vmatpush1.msra.mxu0 0.0
    %453 = vmatprep.subr.mxu0 0.0
    %454 = vmatpush1.msra.mxu0 0.0
    %455 = vmatprep.subr.mxu0 0.0
    %456 = vmatpush1.msra.mxu0 0.0
    %457 = vmatprep.subr.mxu0 0.0
    %458 = vmatpush1.msra.mxu0 0.0
    %459 = vmatprep.mubr.f32.mxu0 0.0
    %460 = vmatmul.mubr.f32.gmra.mrb[0].mxu0 %v387
    %v461 = vpop.f32.mrb[0].mxu0
    %v462 = vadd.f32 %v379, %v461
    %v463 = vpop.f32.mrb[0].mxu0
    %464 = vmatprep.mubr.f32.mxu0 0.0
    %465 = vmatmul.mubr.f32.gmra.mrb[0].mxu0 %v389
    %v466 = vpop.f32.mrb[0].mxu0
    %v467 = vadd.f32 %v384, %v466
    %v468 = vpop.f32.mrb[0].mxu0
    %469 = vdwg.mxu0
    %v470 = vmax.f32 %v462, 0.0
    %v471 = vmax.f32 %v467, 0.0
    %v472 = vld [vmem:[#allocation5 + $0x58] sm:$0xff]
    %474 = vset.pattern.permute.xlu0 9
    %475 = vperm.xlu0 %474, %v472
    %v476 = vpop.permute.xlu0 %475
    %vm478 = vcmask 72704
    %v479 = vsel %vm478, %v472, 0
    %v482 = vsel %vm190, %v471, 0
    %484 = vmatprep.subr.mxu0 0.0
    %485 = vmatpush1.msra.mxu0 %v470
    %486 = vmatprep.subr.mxu0 0.0
    %487 = vmatpush1.msra.mxu0 %v482
    %488 = vmatprep.subr.mxu0 0.0
    %489 = vmatpush1.msra.mxu0 0.0
    %490 = vmatprep.subr.mxu0 0.0
    %491 = vmatpush1.msra.mxu0 0.0
    %492 = vmatprep.subr.mxu0 0.0
    %493 = vmatpush1.msra.mxu0 0.0
    %494 = vmatprep.subr.mxu0 0.0
    %495 = vmatpush1.msra.mxu0 0.0
    %496 = vmatprep.subr.mxu0 0.0
    %497 = vmatpush1.msra.mxu0 0.0
    %498 = vmatprep.subr.mxu0 0.0
    %499 = vmatpush1.msra.mxu0 0.0
    %500 = vmatprep.subr.mxu0 0.0
    %501 = vmatpush1.msra.mxu0 0.0
    %502 = vmatprep.subr.mxu0 0.0
    %503 = vmatpush1.msra.mxu0 0.0
    %504 = vmatprep.subr.mxu0 0.0
    %505 = vmatpush1.msra.mxu0 0.0
    %506 = vmatprep.subr.mxu0 0.0
    %507 = vmatpush1.msra.mxu0 0.0
    %508 = vmatprep.subr.mxu0 0.0
    %509 = vmatpush1.msra.mxu0 0.0
    %510 = vmatprep.subr.mxu0 0.0
    %511 = vmatpush1.msra.mxu0 0.0
    %512 = vmatprep.subr.mxu0 0.0
    %513 = vmatpush1.msra.mxu0 0.0
    %514 = vmatprep.subr.mxu0 0.0
    %515 = vmatpush1.msra.mxu0 0.0
    %516 = vmatprep.subr.mxu0 0.0
    %517 = vmatpush1.msra.mxu0 0.0
    %518 = vmatprep.subr.mxu0 0.0
    %519 = vmatpush1.msra.mxu0 0.0
    %520 = vmatprep.subr.mxu0 0.0
    %521 = vmatpush1.msra.mxu0 0.0
    %522 = vmatprep.subr.mxu0 0.0
    %523 = vmatpush1.msra.mxu0 0.0
    %524 = vmatprep.subr.mxu0 0.0
    %525 = vmatpush1.msra.mxu0 0.0
    %526 = vmatprep.subr.mxu0 0.0
    %527 = vmatpush1.msra.mxu0 0.0
    %528 = vmatprep.subr.mxu0 0.0
    %529 = vmatpush1.msra.mxu0 0.0
    %530 = vmatprep.subr.mxu0 0.0
    %531 = vmatpush1.msra.mxu0 0.0
    %532 = vmatprep.subr.mxu0 0.0
    %533 = vmatpush1.msra.mxu0 0.0
    %534 = vmatprep.subr.mxu0 0.0
    %535 = vmatpush1.msra.mxu0 0.0
    %536 = vmatprep.subr.mxu0 0.0
    %537 = vmatpush1.msra.mxu0 0.0
    %538 = vmatprep.subr.mxu0 0.0
    %539 = vmatpush1.msra.mxu0 0.0
    %540 = vmatprep.subr.mxu0 0.0
    %541 = vmatpush1.msra.mxu0 0.0
    %542 = vmatprep.subr.mxu0 0.0
    %543 = vmatpush1.msra.mxu0 0.0
    %544 = vmatprep.subr.mxu0 0.0
    %545 = vmatpush1.msra.mxu0 0.0
    %546 = vmatprep.subr.mxu0 0.0
    %547 = vmatpush1.msra.mxu0 0.0
    %548 = vmatprep.mubr.f32.mxu0 0.0
    %549 = vmatmul.mubr.f32.gmra.mrb[0].mxu0 %v479
    %v550 = vpop.f32.mrb[0].mxu0
    %v551 = vadd.f32 %v476, %v550
    %v552 = vpop.f32.mrb[0].mxu0
    %553 = vdwg.mxu0
    %554 = vst [vmem:[#allocation7] sm:$0x7] %v551
    // Predicated region
    $region18: #{tpu_custom_call.1} parent=1 // pred_check
      _
    $region19: #{tpu_custom_call.1} parent=1 // pred_check_branch
      %556 = sbr.rel (0) target = $region21
    $region20: #{tpu_custom_call.1} parent=1 // pred_region
      %s558 = ssub.s32 64, 64
      %559 = vsyncadd [#allocation4], %s558
      %s561 = sshll.u32 [#allocation7], 4
      %s562 = int_to_ptr.vmem [resolvable:$true] %s561
      %564 = dma.vmem_to_hbm [thread:$0]  %s562, 64, %s2, [#allocation4]
    $region21: #{tpu_custom_call.1} parent=1 // pred_fallthru
      _
    // Predicated region
    $region22: #{tpu_custom_call.1} parent=1 // pred_check
      _
    $region23: #{tpu_custom_call.1} parent=1 // pred_check_branch
      %566 = sbr.rel (0) target = $region25
    $region24: #{tpu_custom_call.1} parent=1 // pred_region
      %567 = dma.done [#allocation4], 64
    $region25: #{tpu_custom_call.1} parent=1 // pred_fallthru
      _
    %568 = vsyncpa [#allocation3], 1
    %569 = vsyncpa [#allocation6], 1
    %570 = vsyncpa [#allocation4], 1

</llo_original>
